<compile_context>
chip_gen: v5e
topology: v5e:2x2
jax: 0.10.0
libtpu: 0.0.40
codegen_flags: <defaults>
</compile_context>

<pallas_src>
import jax
import jax.numpy as jnp
from jax.experimental import pallas as pl
from jax.experimental.pallas import tpu as pltpu

# --- model dimensions (the original script's globals; small, consistent choices) ---
FEATURE_SIZE = 32
H1 = 64
H2 = 64
H3 = 32
OUT_LAYER = 1
BN_EPS = 1e-5          # nn.BatchNorm1d default

TILE_B = 256           # batch tile (lane dim); multiple of 128, fits easily in VMEM on
                       # v5e/v6e/v7x (per-tile activations are at most 64*256*4 B = 64 KiB)


def transnet_kernel(x_ref,
                    w1_ref, b1_ref,
                    w2_ref, b2_ref,
                    w3_ref, b3_ref,
                    wf_ref, bf_ref,
                    o_ref):
    """Fused MLP on one batch tile.

    x_ref : (FEATURE_SIZE, TILE_B)     activations, batch on lanes
    wN    : (out, in)  BN-folded linear weights (PyTorch layout)
    bN    : (out, 1)   BN-folded biases (broadcast over lanes)
    wf    : (H3, 1)    final-layer weight as a column
    bf    : (1, 1)     final-layer bias
    o_ref : (1, TILE_B)
    """
    h = x_ref[...]                                                        # (F, T)
    h = jnp.maximum(
        jnp.dot(w1_ref[...], h, preferred_element_type=jnp.float32) + b1_ref[...], 0.0)
    h = jnp.maximum(
        jnp.dot(w2_ref[...], h, preferred_element_type=jnp.float32) + b2_ref[...], 0.0)
    h = jnp.maximum(
        jnp.dot(w3_ref[...], h, preferred_element_type=jnp.float32) + b3_ref[...], 0.0)
    # Final Linear(H3 -> 1): elementwise mul + sublane reduce (avoids an N=1 MXU pass),
    # result is a lane-dense (1, TILE_B) slab -> unmasked store.
    o_ref[...] = jnp.sum(h * wf_ref[...], axis=0, keepdims=True) + bf_ref[...]


# --------------------------------------------------------------------------------------
# Parameters (PyTorch layouts) + BN folding
# --------------------------------------------------------------------------------------
def make_params(key):
    """Deterministic synthetic parameters matching TransNet.__init__ shapes (PyTorch layout)."""
    ks = jax.random.split(key, 16)

    def linear(kw, kb, fan_in, fan_out):
        bound = 1.0 / (fan_in ** 0.5)
        w = jax.random.uniform(kw, (fan_out, fan_in), jnp.float32, -bound, bound)  # (out, in)
        b = jax.random.uniform(kb, (fan_out,), jnp.float32, -bound, bound)
        return w, b

    def bn(kmean, kvar, h):
        gamma = jnp.ones((h,), jnp.float32)
        beta = jnp.zeros((h,), jnp.float32)
        mean = 0.1 * jax.random.normal(kmean, (h,), jnp.float32)
        var = jnp.ones((h,), jnp.float32) + 0.05 * jnp.abs(
            jax.random.normal(kvar, (h,), jnp.float32))
        return gamma, beta, mean, var

    w1, b1 = linear(ks[0], ks[1], FEATURE_SIZE, H1)
    g1, be1, m1, v1 = bn(ks[2], ks[3], H1)
    w2, b2 = linear(ks[4], ks[5], H1, H2)
    g2, be2, m2, v2 = bn(ks[6], ks[7], H2)
    w3, b3 = linear(ks[8], ks[9], H2, H3)
    g3, be3, m3, v3 = bn(ks[10], ks[11], H3)
    wf, bf = linear(ks[12], ks[13], H3, OUT_LAYER)

    return (w1, b1, g1, be1, m1, v1,
            w2, b2, g2, be2, m2, v2,
            w3, b3, g3, be3, m3, v3,
            wf, bf)


def _fold_bn(w, b, gamma, beta, mean, var):
    """Fold eval-mode BatchNorm1d into the preceding Linear (PyTorch (out,in) layout)."""
    s = gamma * jax.lax.rsqrt(var + BN_EPS)          # (out,)
    w_f = w * s[:, None]                             # (out, in)
    b_f = (b - mean) * s + beta                      # (out,)
    return w_f, b_f.reshape(-1, 1)                   # bias as column -> broadcast over lanes


# --------------------------------------------------------------------------------------
# Forward
# --------------------------------------------------------------------------------------
@jax.jit
def transnet_forward(x, params):
    (w1, b1, g1, be1, m1, v1,
     w2, b2, g2, be2, m2, v2,
     w3, b3, g3, be3, m3, v3,
     wf, bf) = params

    w1f, b1f = _fold_bn(w1, b1, g1, be1, m1, v1)
    w2f, b2f = _fold_bn(w2, b2, g2, be2, m2, v2)
    w3f, b3f = _fold_bn(w3, b3, g3, be3, m3, v3)
    wf_col = wf.reshape(H3, 1)                       # (1, H3) -> (H3, 1)
    bf_sc = bf.reshape(1, 1)

    batch = x.shape[0]
    b_pad = -(-batch // TILE_B) * TILE_B             # pad batch to a multiple of TILE_B
    xt = jnp.zeros((FEATURE_SIZE, b_pad), jnp.float32)
    xt = xt.at[:, :batch].set(x.astype(jnp.float32).T)   # transpose: batch on lanes

    grid = (b_pad // TILE_B,)

    flops = 2 * b_pad * (FEATURE_SIZE * H1 + H1 * H2 + H2 * H3 + H3)
    bytes_accessed = 4 * (FEATURE_SIZE * b_pad + b_pad
                          + H1 * FEATURE_SIZE + H1 + H2 * H1 + H2 + H3 * H2 + H3 + H3 + 1)
    cost = pl.CostEstimate(flops=flops, transcendentals=0, bytes_accessed=bytes_accessed)

    resident = lambda i: (0, 0)                      # weights/biases stay in VMEM across steps

    out = pl.pallas_call(
        transnet_kernel,
        out_shape=jax.ShapeDtypeStruct((1, b_pad), jnp.float32),
        grid=grid,
        in_specs=[
            pl.BlockSpec((FEATURE_SIZE, TILE_B), lambda i: (0, i)),   # x tile
            pl.BlockSpec((H1, FEATURE_SIZE), resident),               # w1'
            pl.BlockSpec((H1, 1), resident),                          # b1'
            pl.BlockSpec((H2, H1), resident),                         # w2'
            pl.BlockSpec((H2, 1), resident),                          # b2'
            pl.BlockSpec((H3, H2), resident),                         # w3'
            pl.BlockSpec((H3, 1), resident),                          # b3'
            pl.BlockSpec((H3, 1), resident),                          # wf column
            pl.BlockSpec((1, 1), resident),                           # bf
        ],
        out_specs=pl.BlockSpec((1, TILE_B), lambda i: (0, i)),
        compiler_params=pltpu.CompilerParams(dimension_semantics=("parallel",)),
        cost_estimate=cost,
    )(xt, w1f, b1f, w2f, b2f, w3f, b3f, wf_col, bf_sc)

    return out[:, :batch].T                          # back to PyTorch (batch, 1)


# --------------------------------------------------------------------------------------
# Pure-JAX reference (un-folded, PyTorch layout) for correctness checking
# --------------------------------------------------------------------------------------
def transnet_reference(x, params):
    (w1, b1, g1, be1, m1, v1,
     w2, b2, g2, be2, m2, v2,
     w3, b3, g3, be3, m3, v3,
     wf, bf) = params

    def block(h, w, b, g, be, m, v):
        h = h @ w.T + b
        h = (h - m) / jnp.sqrt(v + BN_EPS) * g + be
        return jnp.maximum(h, 0.0)            # Dropout(0.1) is identity in eval mode

    h = block(x, w1, b1, g1, be1, m1, v1)
    h = block(h, w2, b2, g2, be2, m2, v2)
    h = block(h, w3, b3, g3, be3, m3, v3)
    return h @ wf.T + bf


if __name__ == "__main__":
    key = jax.random.PRNGKey(0)
    kx, kp = jax.random.split(key)
    BATCH = 512                                   # 2 grid steps of TILE_B=256
    x = jax.random.normal(kx, (BATCH, FEATURE_SIZE), jnp.float32)
    params = make_params(kp)

    out = transnet_forward(x, params)
    jax.block_until_ready(out)

    ref = transnet_reference(x, params)
    assert out.shape == (BATCH, OUT_LAYER), out.shape
    max_err = float(jnp.max(jnp.abs(out - ref)))
    assert jnp.allclose(out, ref, atol=1e-4, rtol=1e-4), max_err

    print("KERNEL_OK")
</pallas_src>

<mosaic_0001>
module attributes {stable_mosaic.version = 11 : i64} {
  func.func @transnet_kernel(%arg0: i32, %arg1: memref<32x256xf32, #tpu.memory_space<vmem>>, %arg2: memref<64x32xf32, #tpu.memory_space<vmem>>, %arg3: memref<64x1xf32, #tpu.memory_space<vmem>>, %arg4: memref<64x64xf32, #tpu.memory_space<vmem>>, %arg5: memref<64x1xf32, #tpu.memory_space<vmem>>, %arg6: memref<32x64xf32, #tpu.memory_space<vmem>>, %arg7: memref<32x1xf32, #tpu.memory_space<vmem>>, %arg8: memref<32x1xf32, #tpu.memory_space<vmem>>, %arg9: memref<1x1xf32, #tpu.memory_space<vmem>>, %arg10: memref<1x256xf32, #tpu.memory_space<vmem>>) attributes {dimension_semantics = [#tpu.dimension_semantics<parallel>], iteration_bounds = array<i64: 2>, scalar_prefetch = 0 : i64, scratch_operands = 0 : i64, tpu.core_type = #tpu.core_type<tc>, window_params = [{transform_indices = @transform_0, window_bounds = array<i64: 32, 256>}, {pipeline_mode = #tpu.pipeline_mode<synchronous>, transform_indices = @transform_1, window_bounds = array<i64: 64, 32>}, {pipeline_mode = #tpu.pipeline_mode<synchronous>, transform_indices = @transform_2, window_bounds = array<i64: 64, 1>}, {pipeline_mode = #tpu.pipeline_mode<synchronous>, transform_indices = @transform_3, window_bounds = array<i64: 64, 64>}, {pipeline_mode = #tpu.pipeline_mode<synchronous>, transform_indices = @transform_4, window_bounds = array<i64: 64, 1>}, {pipeline_mode = #tpu.pipeline_mode<synchronous>, transform_indices = @transform_5, window_bounds = array<i64: 32, 64>}, {pipeline_mode = #tpu.pipeline_mode<synchronous>, transform_indices = @transform_6, window_bounds = array<i64: 32, 1>}, {pipeline_mode = #tpu.pipeline_mode<synchronous>, transform_indices = @transform_7, window_bounds = array<i64: 32, 1>}, {pipeline_mode = #tpu.pipeline_mode<synchronous>, transform_indices = @transform_8, window_bounds = array<i64: 1, 1>}, {transform_indices = @transform_9, window_bounds = array<i64: 1, 256>}]} {
    %c0 = arith.constant 0 : index
    %c0_0 = arith.constant 0 : index
    %0 = vector.load %arg1[%c0, %c0_0] : memref<32x256xf32, #tpu.memory_space<vmem>>, vector<32x256xf32>
    %c0_1 = arith.constant 0 : index
    %c0_2 = arith.constant 0 : index
    %1 = vector.load %arg2[%c0_1, %c0_2] : memref<64x32xf32, #tpu.memory_space<vmem>>, vector<64x32xf32>
    %cst = arith.constant dense<0.000000e+00> : vector<64x256xf32>
    %2 = tpu.matmul %1, %0, %cst {dimension_numbers = #tpu.dot_dimension_numbers<[1], [0], [0], [1], [0, 0, 1, 1], [], []>} : vector<64x32xf32>, vector<32x256xf32>, vector<64x256xf32> -> vector<64x256xf32>
    %c0_3 = arith.constant 0 : index
    %c0_4 = arith.constant 0 : index
    %3 = vector.load %arg3[%c0_3, %c0_4] : memref<64x1xf32, #tpu.memory_space<vmem>>, vector<64x1xf32>
    %4 = vector.broadcast %3 : vector<64x1xf32> to vector<64x256xf32>
    %5 = arith.addf %2, %4 : vector<64x256xf32>
    %cst_5 = arith.constant 0.000000e+00 : f32
    %6 = vector.broadcast %cst_5 : f32 to vector<64x256xf32>
    %7 = arith.maximumf %5, %6 : vector<64x256xf32>
    %c0_6 = arith.constant 0 : index
    %c0_7 = arith.constant 0 : index
    %8 = vector.load %arg4[%c0_6, %c0_7] : memref<64x64xf32, #tpu.memory_space<vmem>>, vector<64x64xf32>
    %cst_8 = arith.constant dense<0.000000e+00> : vector<64x256xf32>
    %9 = tpu.matmul %8, %7, %cst_8 {dimension_numbers = #tpu.dot_dimension_numbers<[1], [0], [0], [1], [0, 0, 1, 1], [], []>} : vector<64x64xf32>, vector<64x256xf32>, vector<64x256xf32> -> vector<64x256xf32>
    %c0_9 = arith.constant 0 : index
    %c0_10 = arith.constant 0 : index
    %10 = vector.load %arg5[%c0_9, %c0_10] : memref<64x1xf32, #tpu.memory_space<vmem>>, vector<64x1xf32>
    %11 = vector.broadcast %10 : vector<64x1xf32> to vector<64x256xf32>
    %12 = arith.addf %9, %11 : vector<64x256xf32>
    %cst_11 = arith.constant 0.000000e+00 : f32
    %13 = vector.broadcast %cst_11 : f32 to vector<64x256xf32>
    %14 = arith.maximumf %12, %13 : vector<64x256xf32>
    %c0_12 = arith.constant 0 : index
    %c0_13 = arith.constant 0 : index
    %15 = vector.load %arg6[%c0_12, %c0_13] : memref<32x64xf32, #tpu.memory_space<vmem>>, vector<32x64xf32>
    %cst_14 = arith.constant dense<0.000000e+00> : vector<32x256xf32>
    %16 = tpu.matmul %15, %14, %cst_14 {dimension_numbers = #tpu.dot_dimension_numbers<[1], [0], [0], [1], [0, 0, 1, 1], [], []>} : vector<32x64xf32>, vector<64x256xf32>, vector<32x256xf32> -> vector<32x256xf32>
    %c0_15 = arith.constant 0 : index
    %c0_16 = arith.constant 0 : index
    %17 = vector.load %arg7[%c0_15, %c0_16] : memref<32x1xf32, #tpu.memory_space<vmem>>, vector<32x1xf32>
    %18 = vector.broadcast %17 : vector<32x1xf32> to vector<32x256xf32>
    %19 = arith.addf %16, %18 : vector<32x256xf32>
    %cst_17 = arith.constant 0.000000e+00 : f32
    %20 = vector.broadcast %cst_17 : f32 to vector<32x256xf32>
    %21 = arith.maximumf %19, %20 : vector<32x256xf32>
    %c0_18 = arith.constant 0 : index
    %c0_19 = arith.constant 0 : index
    %22 = vector.load %arg8[%c0_18, %c0_19] : memref<32x1xf32, #tpu.memory_space<vmem>>, vector<32x1xf32>
    %23 = vector.broadcast %22 : vector<32x1xf32> to vector<32x256xf32>
    %24 = arith.mulf %21, %23 : vector<32x256xf32>
    %cst_20 = arith.constant dense<0.000000e+00> : vector<256xf32>
    %25 = vector.multi_reduction <add>, %24, %cst_20 [0] : vector<32x256xf32> to vector<256xf32>
    %26 = vector.shape_cast %25 : vector<256xf32> to vector<1x256xf32>
    %c0_21 = arith.constant 0 : index
    %c0_22 = arith.constant 0 : index
    %27 = vector.load %arg9[%c0_21, %c0_22] : memref<1x1xf32, #tpu.memory_space<vmem>>, vector<1x1xf32>
    %28 = vector.broadcast %27 : vector<1x1xf32> to vector<1x256xf32>
    %29 = arith.addf %26, %28 : vector<1x256xf32>
    %c0_23 = arith.constant 0 : index
    %c0_24 = arith.constant 0 : index
    %30 = vector.load %arg10[%c0_23, %c0_24] : memref<1x256xf32, #tpu.memory_space<vmem>>, vector<1x256xf32>
    tpu.vector_store %arg10[%c0_23, %c0_24], %29 {strides = array<i32>} : memref<1x256xf32, #tpu.memory_space<vmem>>, vector<1x256xf32>,
    return
  }
  func.func @transform_0(%arg0: i32) -> (i32, i32) {
    %c0_i32 = arith.constant 0 : i32
    %c0_i32_0 = arith.constant 0 : i32
    return %c0_i32, %arg0 : i32, i32
  }
  func.func @transform_1(%arg0: i32) -> (i32, i32) {
    %c0_i32 = arith.constant 0 : i32
    %c0_i32_0 = arith.constant 0 : i32
    %c0_i32_1 = arith.constant 0 : i32
    return %c0_i32, %c0_i32_0 : i32, i32
  }
  func.func @transform_2(%arg0: i32) -> (i32, i32) {
    %c0_i32 = arith.constant 0 : i32
    %c0_i32_0 = arith.constant 0 : i32
    %c0_i32_1 = arith.constant 0 : i32
    return %c0_i32, %c0_i32_0 : i32, i32
  }
  func.func @transform_3(%arg0: i32) -> (i32, i32) {
    %c0_i32 = arith.constant 0 : i32
    %c0_i32_0 = arith.constant 0 : i32
    %c0_i32_1 = arith.constant 0 : i32
    return %c0_i32, %c0_i32_0 : i32, i32
  }
  func.func @transform_4(%arg0: i32) -> (i32, i32) {
    %c0_i32 = arith.constant 0 : i32
    %c0_i32_0 = arith.constant 0 : i32
    %c0_i32_1 = arith.constant 0 : i32
    return %c0_i32, %c0_i32_0 : i32, i32
  }
  func.func @transform_5(%arg0: i32) -> (i32, i32) {
    %c0_i32 = arith.constant 0 : i32
    %c0_i32_0 = arith.constant 0 : i32
    %c0_i32_1 = arith.constant 0 : i32
    return %c0_i32, %c0_i32_0 : i32, i32
  }
  func.func @transform_6(%arg0: i32) -> (i32, i32) {
    %c0_i32 = arith.constant 0 : i32
    %c0_i32_0 = arith.constant 0 : i32
    %c0_i32_1 = arith.constant 0 : i32
    return %c0_i32, %c0_i32_0 : i32, i32
  }
  func.func @transform_7(%arg0: i32) -> (i32, i32) {
    %c0_i32 = arith.constant 0 : i32
    %c0_i32_0 = arith.constant 0 : i32
    %c0_i32_1 = arith.constant 0 : i32
    return %c0_i32, %c0_i32_0 : i32, i32
  }
  func.func @transform_8(%arg0: i32) -> (i32, i32) {
    %c0_i32 = arith.constant 0 : i32
    %c0_i32_0 = arith.constant 0 : i32
    %c0_i32_1 = arith.constant 0 : i32
    return %c0_i32, %c0_i32_0 : i32, i32
  }
  func.func @transform_9(%arg0: i32) -> (i32, i32) {
    %c0_i32 = arith.constant 0 : i32
    %c0_i32_0 = arith.constant 0 : i32
    return %c0_i32, %arg0 : i32, i32
  }
}

</mosaic_0001>

<llo_original>
// kernel: transnet_forward.1
$region0: #{transnet_forward.1}
  #allocation0 [shape = 'u32[]', space=smem, size = 0x4, offset = 0x4, fixed_abs, tag = 'smem constant byte address 0x4 - core index']
  #allocation1 [shape = 'u32[72,128]{1,0:T(1,128)}', space=vmem, size = 0x9000, scoped, tag = 'internal scratch']
  #allocation2 [shape = 'f32[1,1]{1,0:T(1,128)S(1)}', space=vmem, size = 0x200, scoped, tag = 'scoped memory for transnet_forward.1']
  %s0 = inlined_call_operand.vmem [shape: f32[32,512], index: 0, kind: input, shape index: {}]
  %s1 = inlined_call_operand.vmem [shape: f32[64,32], index: 1, kind: input, shape index: {}]
  %s2 = inlined_call_operand.vmem [shape: f32[64,1], index: 2, kind: input, shape index: {}]
  %s3 = inlined_call_operand.vmem [shape: f32[64,64], index: 3, kind: input, shape index: {}]
  %s4 = inlined_call_operand.vmem [shape: f32[64,1], index: 4, kind: input, shape index: {}]
  %s5 = inlined_call_operand.vmem [shape: f32[32,64], index: 5, kind: input, shape index: {}]
  %s6 = inlined_call_operand.vmem [shape: f32[32,1], index: 6, kind: input, shape index: {}]
  %s7 = inlined_call_operand.vmem [shape: f32[32,1], index: 7, kind: input, shape index: {}]
  %s8 = inlined_call_operand.<no memory space> [shape: f32[1,1], index: 8, kind: input, shape index: {}]
  %s9 = inlined_call_operand.hbm [shape: f32[1,512], index: 9, kind: output, shape index: {}]
  %s10 = sld [smem:[#allocation0]]
  $region92: #{transnet_forward.1} parent=0
    _
  %s12 = ssub.s32 1, %s10
  %s13 = scalar_select 0, %s12, %s10
  %v14 = vstv %s8
  %15 = vst [vmem:[#allocation2] sm:$0x1] %v14
  $region1: #{transnet_forward.1} parent=0
    #allocation3 [shape = 'u8[65536]{0}', space=vmem, size = 0x10000, scoped, tag = 'input window, operand 0']
    #allocation4 [shape = 'u8[2048]{0}', space=vmem, size = 0x800, scoped, tag = 'output window, operand 0']
    #allocation5 [shape = 's32[2]{0}', space=sflag, size = 0x8, scoped, tag = 'scoped memory for transnet_forward.1']
    %16 = vsyncpa [#allocation5], 0
    %s17 = scalar_lea.sflag [#allocation5], 1
    %18 = vsyncpa %s17, 0
    loop: start=0, step=1, limit=4
    $region2: #{transnet_forward.1} parent=1 // loop_pre_header
      _
    $region3: #{transnet_forward.1} parent=1 // loop_header
      %s20 = sphi 0, %s24
      %p21 = scmp.ge.s32.totalorder %s20, 4
      %s30 = sphi 0, %s32
      %s33 = sphi 0, %s30
      %s34 = sphi 0, %s33
      %s50 = sphi 0, %s34
      %s54 = sphi 0, %s54
      %s56 = sphi 0, %s54
      %s57 = sphi 0, %s56
      %s71 = sphi 0, %s57
      %s75 = sphi 0, %s75
      %s77 = sphi 0, %s75
      %s78 = sphi 0, %s77
      %s92 = sphi 0, %s78
      %s96 = sphi 0, %s96
      %s98 = sphi 0, %s96
      %s99 = sphi 0, %s98
      %s113 = sphi 0, %s99
      %s117 = sphi 0, %s117
      %s119 = sphi 0, %s117
      %s120 = sphi 0, %s119
      %s134 = sphi 0, %s120
      %s138 = sphi 0, %s138
      %s140 = sphi 0, %s138
      %s141 = sphi 0, %s140
      %s155 = sphi 0, %s141
      %s159 = sphi 0, %s159
      %s161 = sphi 0, %s159
      %s162 = sphi 0, %s161
      %s176 = sphi 0, %s162
      %s180 = sphi 0, %s180
      %s182 = sphi 0, %s180
      %s183 = sphi 0, %s182
      %s197 = sphi 0, %s183
      %s201 = sphi 0, %s201
      %s203 = sphi 0, %s201
      %s204 = sphi 0, %s203
      %s218 = sphi 0, %s204
      %s224 = sphi 0, %s226
      %s227 = sphi 0, %s224
      %s228 = sphi 0, %s227
      %s244 = sphi 0, %s228
    $region4: #{transnet_forward.1} parent=1 // loop_header_branch
      %23 = sbr.rel (%p21) target = $region8
    $region5: #{transnet_forward.1} parent=1 // loop_body
      %s25 = ssub.s32 %s20, 1
      %s26 = ssub.s32 %s20, 2
      %s27 = sadd.s32 %s20, 1
      %s28 = ssub.s32 %s20, %s27
      %p29 = scmp.eq.s32.totalorder %s28, 0
      %s31 = sadd.s32 %s30, 1
      %s32 = scalar_select %p29, %s30, %s31
      %p35 = pneg %p29
      %p36 = scmp.eq.s32.totalorder %s20, 1
      %p37 = por %p35, %p36
      %p38 = scmp.ne.s32.totalorder %s30, %s33
      %p39 = scmp.eq.s32.totalorder %s20, 0
      %p40 = por %p38, %p39
      %p41 = scmp.ne.s32.totalorder %s30, %s33
      %p42 = scmp.eq.s32.totalorder %s25, 1
      %p43 = por %p41, %p42
      %p44 = scmp.ne.s32.totalorder %s33, %s34
      %p45 = scmp.eq.s32.totalorder %s25, 0
      %p46 = por %p44, %p45
      %p47 = scmp.ne.s32.totalorder %s33, %s34
      %p48 = scmp.eq.s32.totalorder %s26, 1
      %p49 = por %p47, %p48
      %p51 = scmp.ne.s32.totalorder %s34, %s50
      %p52 = scmp.eq.s32.totalorder %s26, 0
      %p53 = por %p51, %p52
      %s55 = sadd.s32 %s54, 1
      %p58 = scmp.eq.s32.totalorder %s20, 1
      %p59 = scmp.ne.s32.totalorder %s54, %s56
      %p60 = scmp.eq.s32.totalorder %s20, 0
      %p61 = por %p59, %p60
      %p62 = scmp.ne.s32.totalorder %s54, %s56
      %p63 = scmp.eq.s32.totalorder %s25, 1
      %p64 = por %p62, %p63
      %p65 = scmp.ne.s32.totalorder %s56, %s57
      %p66 = scmp.eq.s32.totalorder %s25, 0
      %p67 = por %p65, %p66
      %p68 = scmp.ne.s32.totalorder %s56, %s57
      %p69 = scmp.eq.s32.totalorder %s26, 1
      %p70 = por %p68, %p69
      %p72 = scmp.ne.s32.totalorder %s57, %s71
      %p73 = scmp.eq.s32.totalorder %s26, 0
      %p74 = por %p72, %p73
      %s76 = sadd.s32 %s75, 1
      %p79 = scmp.eq.s32.totalorder %s20, 1
      %p80 = scmp.ne.s32.totalorder %s75, %s77
      %p81 = scmp.eq.s32.totalorder %s20, 0
      %p82 = por %p80, %p81
      %p83 = scmp.ne.s32.totalorder %s75, %s77
      %p84 = scmp.eq.s32.totalorder %s25, 1
      %p85 = por %p83, %p84
      %p86 = scmp.ne.s32.totalorder %s77, %s78
      %p87 = scmp.eq.s32.totalorder %s25, 0
      %p88 = por %p86, %p87
      %p89 = scmp.ne.s32.totalorder %s77, %s78
      %p90 = scmp.eq.s32.totalorder %s26, 1
      %p91 = por %p89, %p90
      %p93 = scmp.ne.s32.totalorder %s78, %s92
      %p94 = scmp.eq.s32.totalorder %s26, 0
      %p95 = por %p93, %p94
      %s97 = sadd.s32 %s96, 1
      %p100 = scmp.eq.s32.totalorder %s20, 1
      %p101 = scmp.ne.s32.totalorder %s96, %s98
      %p102 = scmp.eq.s32.totalorder %s20, 0
      %p103 = por %p101, %p102
      %p104 = scmp.ne.s32.totalorder %s96, %s98
      %p105 = scmp.eq.s32.totalorder %s25, 1
      %p106 = por %p104, %p105
      %p107 = scmp.ne.s32.totalorder %s98, %s99
      %p108 = scmp.eq.s32.totalorder %s25, 0
      %p109 = por %p107, %p108
      %p110 = scmp.ne.s32.totalorder %s98, %s99
      %p111 = scmp.eq.s32.totalorder %s26, 1
      %p112 = por %p110, %p111
      %p114 = scmp.ne.s32.totalorder %s99, %s113
      %p115 = scmp.eq.s32.totalorder %s26, 0
      %p116 = por %p114, %p115
      %s118 = sadd.s32 %s117, 1
      %p121 = scmp.eq.s32.totalorder %s20, 1
      %p122 = scmp.ne.s32.totalorder %s117, %s119
      %p123 = scmp.eq.s32.totalorder %s20, 0
      %p124 = por %p122, %p123
      %p125 = scmp.ne.s32.totalorder %s117, %s119
      %p126 = scmp.eq.s32.totalorder %s25, 1
      %p127 = por %p125, %p126
      %p128 = scmp.ne.s32.totalorder %s119, %s120
      %p129 = scmp.eq.s32.totalorder %s25, 0
      %p130 = por %p128, %p129
      %p131 = scmp.ne.s32.totalorder %s119, %s120
      %p132 = scmp.eq.s32.totalorder %s26, 1
      %p133 = por %p131, %p132
      %p135 = scmp.ne.s32.totalorder %s120, %s134
      %p136 = scmp.eq.s32.totalorder %s26, 0
      %p137 = por %p135, %p136
      %s139 = sadd.s32 %s138, 1
      %p142 = scmp.eq.s32.totalorder %s20, 1
      %p143 = scmp.ne.s32.totalorder %s138, %s140
      %p144 = scmp.eq.s32.totalorder %s20, 0
      %p145 = por %p143, %p144
      %p146 = scmp.ne.s32.totalorder %s138, %s140
      %p147 = scmp.eq.s32.totalorder %s25, 1
      %p148 = por %p146, %p147
      %p149 = scmp.ne.s32.totalorder %s140, %s141
      %p150 = scmp.eq.s32.totalorder %s25, 0
      %p151 = por %p149, %p150
      %p152 = scmp.ne.s32.totalorder %s140, %s141
      %p153 = scmp.eq.s32.totalorder %s26, 1
      %p154 = por %p152, %p153
      %p156 = scmp.ne.s32.totalorder %s141, %s155
      %p157 = scmp.eq.s32.totalorder %s26, 0
      %p158 = por %p156, %p157
      %s160 = sadd.s32 %s159, 1
      %p163 = scmp.eq.s32.totalorder %s20, 1
      %p164 = scmp.ne.s32.totalorder %s159, %s161
      %p165 = scmp.eq.s32.totalorder %s20, 0
      %p166 = por %p164, %p165
      %p167 = scmp.ne.s32.totalorder %s159, %s161
      %p168 = scmp.eq.s32.totalorder %s25, 1
      %p169 = por %p167, %p168
      %p170 = scmp.ne.s32.totalorder %s161, %s162
      %p171 = scmp.eq.s32.totalorder %s25, 0
      %p172 = por %p170, %p171
      %p173 = scmp.ne.s32.totalorder %s161, %s162
      %p174 = scmp.eq.s32.totalorder %s26, 1
      %p175 = por %p173, %p174
      %p177 = scmp.ne.s32.totalorder %s162, %s176
      %p178 = scmp.eq.s32.totalorder %s26, 0
      %p179 = por %p177, %p178
      %s181 = sadd.s32 %s180, 1
      %p184 = scmp.eq.s32.totalorder %s20, 1
      %p185 = scmp.ne.s32.totalorder %s180, %s182
      %p186 = scmp.eq.s32.totalorder %s20, 0
      %p187 = por %p185, %p186
      %p188 = scmp.ne.s32.totalorder %s180, %s182
      %p189 = scmp.eq.s32.totalorder %s25, 1
      %p190 = por %p188, %p189
      %p191 = scmp.ne.s32.totalorder %s182, %s183
      %p192 = scmp.eq.s32.totalorder %s25, 0
      %p193 = por %p191, %p192
      %p194 = scmp.ne.s32.totalorder %s182, %s183
      %p195 = scmp.eq.s32.totalorder %s26, 1
      %p196 = por %p194, %p195
      %p198 = scmp.ne.s32.totalorder %s183, %s197
      %p199 = scmp.eq.s32.totalorder %s26, 0
      %p200 = por %p198, %p199
      %s202 = sadd.s32 %s201, 1
      %p205 = scmp.eq.s32.totalorder %s20, 1
      %p206 = scmp.ne.s32.totalorder %s201, %s203
      %p207 = scmp.eq.s32.totalorder %s20, 0
      %p208 = por %p206, %p207
      %p209 = scmp.ne.s32.totalorder %s201, %s203
      %p210 = scmp.eq.s32.totalorder %s25, 1
      %p211 = por %p209, %p210
      %p212 = scmp.ne.s32.totalorder %s203, %s204
      %p213 = scmp.eq.s32.totalorder %s25, 0
      %p214 = por %p212, %p213
      %p215 = scmp.ne.s32.totalorder %s203, %s204
      %p216 = scmp.eq.s32.totalorder %s26, 1
      %p217 = por %p215, %p216
      %p219 = scmp.ne.s32.totalorder %s204, %s218
      %p220 = scmp.eq.s32.totalorder %s26, 0
      %p221 = por %p219, %p220
      %s222 = ssub.s32 %s20, %s27
      %p223 = scmp.eq.s32.totalorder %s222, 0
      %s225 = sadd.s32 %s224, 1
      %s226 = scalar_select %p223, %s224, %s225
      %p229 = pneg %p223
      %p230 = scmp.eq.s32.totalorder %s20, 1
      %p231 = por %p229, %p230
      %p232 = scmp.ne.s32.totalorder %s224, %s227
      %p233 = scmp.eq.s32.totalorder %s20, 0
      %p234 = por %p232, %p233
      %p235 = scmp.ne.s32.totalorder %s224, %s227
      %p236 = scmp.eq.s32.totalorder %s25, 1
      %p237 = por %p235, %p236
      %p238 = scmp.ne.s32.totalorder %s227, %s228
      %p239 = scmp.eq.s32.totalorder %s25, 0
      %p240 = por %p238, %p239
      %p241 = scmp.ne.s32.totalorder %s227, %s228
      %p242 = scmp.eq.s32.totalorder %s26, 1
      %p243 = por %p241, %p242
      %p245 = scmp.ne.s32.totalorder %s228, %s244
      %p246 = scmp.eq.s32.totalorder %s26, 0
      %p247 = por %p245, %p246
      %p248 = scmp.le.s32.totalorder 1, %s20
      %p249 = scmp.lt.s32.totalorder %s20, 3
      %p250 = pnand %p248, %p249
      %p251 = pneg %p250
      // Predicated region
      $region9: #{transnet_forward.1} parent=5 // pred_check
        _
      $region10: #{transnet_forward.1} parent=5 // pred_check_branch
        %253 = sbr.rel (%p250) target = $region12
      $region11: #{transnet_forward.1} parent=5 // pred_region
        %s254 = ssub.s32 %s20, 1
        // Predicated region
        $region13: #{transnet_forward.1} parent=11 // pred_check
          %p255 = pneg %p67
        $region14: #{transnet_forward.1} parent=11 // pred_check_branch
          %257 = sbr.rel (%p255) target = $region16
        $region15: #{transnet_forward.1} parent=11 // pred_region
          _
        $region16: #{transnet_forward.1} parent=11 // pred_fallthru
          _
        // Predicated region
        $region17: #{transnet_forward.1} parent=11 // pred_check
          %p258 = pneg %p88
        $region18: #{transnet_forward.1} parent=11 // pred_check_branch
          %260 = sbr.rel (%p258) target = $region20
        $region19: #{transnet_forward.1} parent=11 // pred_region
          _
        $region20: #{transnet_forward.1} parent=11 // pred_fallthru
          _
        // Predicated region
        $region21: #{transnet_forward.1} parent=11 // pred_check
          %p261 = pneg %p109
        $region22: #{transnet_forward.1} parent=11 // pred_check_branch
          %263 = sbr.rel (%p261) target = $region24
        $region23: #{transnet_forward.1} parent=11 // pred_region
          _
        $region24: #{transnet_forward.1} parent=11 // pred_fallthru
          _
        // Predicated region
        $region25: #{transnet_forward.1} parent=11 // pred_check
          %p264 = pneg %p130
        $region26: #{transnet_forward.1} parent=11 // pred_check_branch
          %266 = sbr.rel (%p264) target = $region28
        $region27: #{transnet_forward.1} parent=11 // pred_region
          _
        $region28: #{transnet_forward.1} parent=11 // pred_fallthru
          _
        // Predicated region
        $region29: #{transnet_forward.1} parent=11 // pred_check
          %p267 = pneg %p151
        $region30: #{transnet_forward.1} parent=11 // pred_check_branch
          %269 = sbr.rel (%p267) target = $region32
        $region31: #{transnet_forward.1} parent=11 // pred_region
          _
        $region32: #{transnet_forward.1} parent=11 // pred_fallthru
          _
        // Predicated region
        $region33: #{transnet_forward.1} parent=11 // pred_check
          %p270 = pneg %p172
        $region34: #{transnet_forward.1} parent=11 // pred_check_branch
          %272 = sbr.rel (%p270) target = $region36
        $region35: #{transnet_forward.1} parent=11 // pred_region
          _
        $region36: #{transnet_forward.1} parent=11 // pred_fallthru
          _
        // Predicated region
        $region37: #{transnet_forward.1} parent=11 // pred_check
          %p273 = pneg %p193
        $region38: #{transnet_forward.1} parent=11 // pred_check_branch
          %275 = sbr.rel (%p273) target = $region40
        $region39: #{transnet_forward.1} parent=11 // pred_region
          _
        $region40: #{transnet_forward.1} parent=11 // pred_fallthru
          _
        // Predicated region
        $region41: #{transnet_forward.1} parent=11 // pred_check
          %p276 = pneg %p214
        $region42: #{transnet_forward.1} parent=11 // pred_check_branch
          %278 = sbr.rel (%p276) target = $region44
        $region43: #{transnet_forward.1} parent=11 // pred_region
          _
        $region44: #{transnet_forward.1} parent=11 // pred_fallthru
          _
      $region12: #{transnet_forward.1} parent=5 // pred_fallthru
        _
      %p279 = scmp.lt.s32.totalorder %s20, 2
      // Predicated region
      $region45: #{transnet_forward.1} parent=5 // pred_check
        %p280 = pneg %p279
      $region46: #{transnet_forward.1} parent=5 // pred_check_branch
        %282 = sbr.rel (%p280) target = $region48
      $region47: #{transnet_forward.1} parent=5 // pred_region
        // Predicated region
        $region49: #{transnet_forward.1} parent=47 // pred_check
          %p283 = pneg %p40
        $region50: #{transnet_forward.1} parent=47 // pred_check_branch
          %285 = sbr.rel (%p283) target = $region52
        $region51: #{transnet_forward.1} parent=47 // pred_region
          %s286 = sand.u32 %s30, 1
          %s287 = sand.u32 %s30, 1
          %s288 = smul.addr %s287, 64
          %s289 = scalar_lea.vmem [#allocation3], %s288
          %s290 = smul.u32 2, %s20
          %s291 = smul.addr %s290, 8
          %s292 = scalar_lea.vmem %s0, %s291
          // Predicated region
          $region53: #{transnet_forward.1} parent=51 // pred_check
            _
          $region54: #{transnet_forward.1} parent=51 // pred_check_branch
            %294 = sbr.rel (0) target = $region56
          $region55: #{transnet_forward.1} parent=51 // pred_region
            // Predicated region
            $region57: #{transnet_forward.1} parent=55 // pred_check
              _
            $region58: #{transnet_forward.1} parent=55 // pred_check_branch
              %296 = sbr.rel (0) target = $region60
            $region59: #{transnet_forward.1} parent=55 // pred_region
              loop: start=0, step=1, limit=1
              $region61: #{transnet_forward.1} parent=59 // loop_pre_header
                _
              $region62: #{transnet_forward.1} parent=59 // loop_header
                %s298 = sphi 0, %s302
                %p299 = scmp.ge.s32.totalorder %s298, 1
                %s303 = sphi %s292, %s292
                %s304 = sphi %s289, %s289
              $region63: #{transnet_forward.1} parent=59 // loop_header_branch
                %301 = sbr.rel (%p299) target = $region67
              $region64: #{transnet_forward.1} parent=59 // loop_body
                %v305 = vld [vmem:[%s303] sm:$0xff]
                %306 = vst [vmem:[%s304] sm:$0xff] %v305
                %v307 = vld [vmem:[%s303 + $0x8] sm:$0xff]
                %308 = vst [vmem:[%s304 + $0x8] sm:$0xff] %v307
                %v309 = vld [vmem:[%s303 + $0x20] sm:$0xff]
                %310 = vst [vmem:[%s304 + $0x10] sm:$0xff] %v309
                %v311 = vld [vmem:[%s303 + $0x28] sm:$0xff]
                %312 = vst [vmem:[%s304 + $0x18] sm:$0xff] %v311
                %v313 = vld [vmem:[%s303 + $0x40] sm:$0xff]
                %314 = vst [vmem:[%s304 + $0x20] sm:$0xff] %v313
                %v315 = vld [vmem:[%s303 + $0x48] sm:$0xff]
                %316 = vst [vmem:[%s304 + $0x28] sm:$0xff] %v315
                %v317 = vld [vmem:[%s303 + $0x60] sm:$0xff]
                %318 = vst [vmem:[%s304 + $0x30] sm:$0xff] %v317
                %v319 = vld [vmem:[%s303 + $0x68] sm:$0xff]
                %320 = vst [vmem:[%s304 + $0x38] sm:$0xff] %v319
              $region65: #{transnet_forward.1} parent=59 // loop_footer
                %s302 = sadd.s32 1, %s298
              $region66: #{transnet_forward.1} parent=59 // loop_footer_branch
                %297 = sbr.rel target = $region62
              $region67: #{transnet_forward.1} parent=59 // loop_exit
                _
            $region60: #{transnet_forward.1} parent=55 // pred_fallthru
              _
            // Predicated region
            $region68: #{transnet_forward.1} parent=55 // pred_check
              _
            $region69: #{transnet_forward.1} parent=55 // pred_check_branch
              %322 = sbr.rel target = $region71
            $region70: #{transnet_forward.1} parent=55 // pred_region
              _
            $region71: #{transnet_forward.1} parent=55 // pred_fallthru
              _
          $region56: #{transnet_forward.1} parent=51 // pred_fallthru
            _
          %323 = vnop
        $region52: #{transnet_forward.1} parent=47 // pred_fallthru
          _
      $region48: #{transnet_forward.1} parent=5 // pred_fallthru
        _
      %p324 = scmp.le.s32.totalorder 1, %s20
      %p325 = scmp.lt.s32.totalorder %s20, 3
      %p326 = pnand %p324, %p325
      %p327 = pneg %p326
      // Predicated region
      $region72: #{transnet_forward.1} parent=5 // pred_check
        _
      $region73: #{transnet_forward.1} parent=5 // pred_check_branch
        %329 = sbr.rel (%p326) target = $region75
      $region74: #{transnet_forward.1} parent=5 // pred_region
        %s330 = ssub.s32 %s20, 1
        %s331 = sand.u32 %s33, 1
        %s332 = sand.u32 %s33, 1
        %s333 = smul.addr %s332, 64
        %s334 = scalar_lea.vmem [#allocation3], %s333
        // Predicated region
        $region76: #{transnet_forward.1} parent=74 // pred_check
          %p335 = pneg %p46
        $region77: #{transnet_forward.1} parent=74 // pred_check_branch
          %337 = sbr.rel (%p335) target = $region79
        $region78: #{transnet_forward.1} parent=74 // pred_region
          _
        $region79: #{transnet_forward.1} parent=74 // pred_fallthru
          _
        %s338 = sand.u32 %s33, 1
        %s339 = sand.u32 %s33, 1
        %s340 = smul.addr %s339, 64
        %s341 = scalar_lea.vmem [#allocation3], %s340
        %p342 = pneg %p46
        %p343 = pneg %p43
        %p344 = pneg %p67
        %p345 = pneg %p64
        %p346 = pneg %p88
        %p347 = pneg %p85
        %p348 = pneg %p109
        %p349 = pneg %p106
        %p350 = pneg %p130
        %p351 = pneg %p127
        %p352 = pneg %p151
        %p353 = pneg %p148
        %p354 = pneg %p172
        %p355 = pneg %p169
        %p356 = pneg %p193
        %p357 = pneg %p190
        %p358 = pneg %p214
        %p359 = pneg %p211
        %p360 = pneg %p240
        %p361 = pneg %p237
        %s362 = sand.u32 %s227, 1
        %s363 = scalar_lea.sflag [#allocation5], %s362
        %s364 = sand.u32 %s227, 1
        %s365 = smul.addr %s364, 2
        %s366 = scalar_lea.vmem [#allocation4], %s365
        %s367 = smul.u32 2, %s25
        %s368 = smul.u32 2, %s25
        %v369 = vld [vmem:[%s334] sm:$0xff]
        %v370 = vld [vmem:[%s334 + $0x8] sm:$0xff]
        %v371 = vld [vmem:[%s334 + $0x10] sm:$0xff]
        %v372 = vld [vmem:[%s334 + $0x18] sm:$0xff]
        %v373 = vld [vmem:[%s334 + $0x20] sm:$0xff]
        %v374 = vld [vmem:[%s334 + $0x28] sm:$0xff]
        %v375 = vld [vmem:[%s334 + $0x30] sm:$0xff]
        %v376 = vld [vmem:[%s334 + $0x38] sm:$0xff]
        %v377 = vld [vmem:[%s1] sm:$0xff]
        %v378 = vld [vmem:[%s1 + $0x8] sm:$0xff]
        %v379 = vld [vmem:[%s1 + $0x10] sm:$0xff]
        %v380 = vld [vmem:[%s1 + $0x18] sm:$0xff]
        %v381 = vld [vmem:[%s1 + $0x20] sm:$0xff]
        %v382 = vld [vmem:[%s1 + $0x28] sm:$0xff]
        %v383 = vld [vmem:[%s1 + $0x30] sm:$0xff]
        %v384 = vld [vmem:[%s1 + $0x38] sm:$0xff]
        %v385 = vld [vmem:[%s2] sm:$0xff]
        %v386 = vld [vmem:[%s2 + $0x8] sm:$0xff]
        %v387 = vld [vmem:[%s2 + $0x10] sm:$0xff]
        %v388 = vld [vmem:[%s2 + $0x18] sm:$0xff]
        %v389 = vld [vmem:[%s2 + $0x20] sm:$0xff]
        %v390 = vld [vmem:[%s2 + $0x28] sm:$0xff]
        %v391 = vld [vmem:[%s2 + $0x30] sm:$0xff]
        %v392 = vld [vmem:[%s2 + $0x38] sm:$0xff]
        %394 = vset.pattern.permute.xlu0 0
        %395 = vperm.xlu0 %394, %v385
        %v396 = vpop.permute.xlu0 %395
        %399 = vset.pattern.permute.xlu0 0
        %400 = vperm.xlu0 %399, %v386
        %v401 = vpop.permute.xlu0 %400
        %404 = vset.pattern.permute.xlu0 0
        %405 = vperm.xlu0 %404, %v387
        %v406 = vpop.permute.xlu0 %405
        %409 = vset.pattern.permute.xlu0 0
        %410 = vperm.xlu0 %409, %v388
        %v411 = vpop.permute.xlu0 %410
        %414 = vset.pattern.permute.xlu0 0
        %415 = vperm.xlu0 %414, %v389
        %v416 = vpop.permute.xlu0 %415
        %419 = vset.pattern.permute.xlu0 0
        %420 = vperm.xlu0 %419, %v390
        %v421 = vpop.permute.xlu0 %420
        %424 = vset.pattern.permute.xlu0 0
        %425 = vperm.xlu0 %424, %v391
        %v426 = vpop.permute.xlu0 %425
        %429 = vset.pattern.permute.xlu0 0
        %430 = vperm.xlu0 %429, %v392
        %v431 = vpop.permute.xlu0 %430
        %vm433 = vcmask 261120
        %v435 = vsel %vm433, %v377, 0
        %v438 = vsel %vm433, %v378, 0
        %v441 = vsel %vm433, %v379, 0
        %v444 = vsel %vm433, %v380, 0
        %v447 = vsel %vm433, %v381, 0
        %v450 = vsel %vm433, %v382, 0
        %v453 = vsel %vm433, %v383, 0
        %v456 = vsel %vm433, %v384, 0
        %458 = vmatpush.msra.mxu0 0.0
        %459 = vmatpush.msra.mxu0 0.0
        %460 = vmatpush.msra.mxu0 0.0
        %461 = vmatpush.msra.mxu0 0.0
        %462 = vmatpush.msra.mxu0 0.0
        %463 = vmatpush.msra.mxu0 0.0
        %464 = vmatpush.msra.mxu0 0.0
        %465 = vmatpush.msra.mxu0 0.0
        %466 = vmatpush.msra.mxu0 0.0
        %467 = vmatpush.msra.mxu0 0.0
        %468 = vmatpush.msra.mxu0 0.0
        %469 = vmatpush.msra.mxu0 0.0
        %470 = vmatpush.msra.mxu0 %v375
        %471 = vmatpush.msra.mxu0 %v373
        %472 = vmatpush.msra.mxu0 %v371
        %473 = vmatpush.msra.mxu0 %v369
        %474 = vmatmul.f32.gmra.mxu0 %v435
        %v475 = vpop.f32.mrf.mxu0
        %v476 = vadd.f32 %v396, %v475
        %477 = vmatmul.f32.gmra.mxu0 %v438
        %v478 = vpop.f32.mrf.mxu0
        %v479 = vadd.f32 %v401, %v478
        %480 = vmatmul.f32.gmra.mxu0 %v441
        %v481 = vpop.f32.mrf.mxu0
        %v482 = vadd.f32 %v406, %v481
        %483 = vmatmul.f32.gmra.mxu0 %v444
        %v484 = vpop.f32.mrf.mxu0
        %v485 = vadd.f32 %v411, %v484
        %486 = vmatmul.f32.gmra.mxu0 %v447
        %v487 = vpop.f32.mrf.mxu0
        %v488 = vadd.f32 %v416, %v487
        %489 = vmatmul.f32.gmra.mxu0 %v450
        %v490 = vpop.f32.mrf.mxu0
        %v491 = vadd.f32 %v421, %v490
        %492 = vmatmul.f32.gmra.mxu0 %v453
        %v493 = vpop.f32.mrf.mxu0
        %v494 = vadd.f32 %v426, %v493
        %495 = vmatmul.f32.gmra.mxu0 %v456
        %v496 = vpop.f32.mrf.mxu0
        %v497 = vadd.f32 %v431, %v496
        %498 = vdwg.mxu0
        %499 = vmatpush.msra.mxu0 0.0
        %500 = vmatpush.msra.mxu0 0.0
        %501 = vmatpush.msra.mxu0 0.0
        %502 = vmatpush.msra.mxu0 0.0
        %503 = vmatpush.msra.mxu0 0.0
        %504 = vmatpush.msra.mxu0 0.0
        %505 = vmatpush.msra.mxu0 0.0
        %506 = vmatpush.msra.mxu0 0.0
        %507 = vmatpush.msra.mxu0 0.0
        %508 = vmatpush.msra.mxu0 0.0
        %509 = vmatpush.msra.mxu0 0.0
        %510 = vmatpush.msra.mxu0 0.0
        %511 = vmatpush.msra.mxu0 %v376
        %512 = vmatpush.msra.mxu0 %v374
        %513 = vmatpush.msra.mxu0 %v372
        %514 = vmatpush.msra.mxu0 %v370
        %515 = vmatmul.f32.gmra.mxu0 %v435
        %v516 = vpop.f32.mrf.mxu0
        %v517 = vadd.f32 %v396, %v516
        %518 = vmatmul.f32.gmra.mxu0 %v438
        %v519 = vpop.f32.mrf.mxu0
        %v520 = vadd.f32 %v401, %v519
        %521 = vmatmul.f32.gmra.mxu0 %v441
        %v522 = vpop.f32.mrf.mxu0
        %v523 = vadd.f32 %v406, %v522
        %524 = vmatmul.f32.gmra.mxu0 %v444
        %v525 = vpop.f32.mrf.mxu0
        %v526 = vadd.f32 %v411, %v525
        %527 = vmatmul.f32.gmra.mxu0 %v447
        %v528 = vpop.f32.mrf.mxu0
        %v529 = vadd.f32 %v416, %v528
        %530 = vmatmul.f32.gmra.mxu0 %v450
        %v531 = vpop.f32.mrf.mxu0
        %v532 = vadd.f32 %v421, %v531
        %533 = vmatmul.f32.gmra.mxu0 %v453
        %v534 = vpop.f32.mrf.mxu0
        %v535 = vadd.f32 %v426, %v534
        %536 = vmatmul.f32.gmra.mxu0 %v456
        %v537 = vpop.f32.mrf.mxu0
        %v538 = vadd.f32 %v431, %v537
        %539 = vdwg.mxu0
        %v540 = vmax.f32 %v476, 0.0
        %v541 = vmax.f32 %v517, 0.0
        %v542 = vmax.f32 %v479, 0.0
        %v543 = vmax.f32 %v520, 0.0
        %v544 = vmax.f32 %v482, 0.0
        %v545 = vmax.f32 %v523, 0.0
        %v546 = vmax.f32 %v485, 0.0
        %v547 = vmax.f32 %v526, 0.0
        %v548 = vmax.f32 %v488, 0.0
        %v549 = vmax.f32 %v529, 0.0
        %v550 = vmax.f32 %v491, 0.0
        %v551 = vmax.f32 %v532, 0.0
        %v552 = vmax.f32 %v494, 0.0
        %v553 = vmax.f32 %v535, 0.0
        %v554 = vmax.f32 %v497, 0.0
        %v555 = vmax.f32 %v538, 0.0
        %v556 = vld [vmem:[%s3] sm:$0xff]
        %v557 = vld [vmem:[%s3 + $0x8] sm:$0xff]
        %v558 = vld [vmem:[%s3 + $0x10] sm:$0xff]
        %v559 = vld [vmem:[%s3 + $0x18] sm:$0xff]
        %v560 = vld [vmem:[%s3 + $0x20] sm:$0xff]
        %v561 = vld [vmem:[%s3 + $0x28] sm:$0xff]
        %v562 = vld [vmem:[%s3 + $0x30] sm:$0xff]
        %v563 = vld [vmem:[%s3 + $0x38] sm:$0xff]
        %v564 = vld [vmem:[%s4] sm:$0xff]
        %v565 = vld [vmem:[%s4 + $0x8] sm:$0xff]
        %v566 = vld [vmem:[%s4 + $0x10] sm:$0xff]
        %v567 = vld [vmem:[%s4 + $0x18] sm:$0xff]
        %v568 = vld [vmem:[%s4 + $0x20] sm:$0xff]
        %v569 = vld [vmem:[%s4 + $0x28] sm:$0xff]
        %v570 = vld [vmem:[%s4 + $0x30] sm:$0xff]
        %v571 = vld [vmem:[%s4 + $0x38] sm:$0xff]
        %573 = vset.pattern.permute.xlu0 0
        %574 = vperm.xlu0 %573, %v564
        %v575 = vpop.permute.xlu0 %574
        %578 = vset.pattern.permute.xlu0 0
        %579 = vperm.xlu0 %578, %v565
        %v580 = vpop.permute.xlu0 %579
        %583 = vset.pattern.permute.xlu0 0
        %584 = vperm.xlu0 %583, %v566
        %v585 = vpop.permute.xlu0 %584
        %588 = vset.pattern.permute.xlu0 0
        %589 = vperm.xlu0 %588, %v567
        %v590 = vpop.permute.xlu0 %589
        %593 = vset.pattern.permute.xlu0 0
        %594 = vperm.xlu0 %593, %v568
        %v595 = vpop.permute.xlu0 %594
        %598 = vset.pattern.permute.xlu0 0
        %599 = vperm.xlu0 %598, %v569
        %v600 = vpop.permute.xlu0 %599
        %603 = vset.pattern.permute.xlu0 0
        %604 = vperm.xlu0 %603, %v570
        %v605 = vpop.permute.xlu0 %604
        %608 = vset.pattern.permute.xlu0 0
        %609 = vperm.xlu0 %608, %v571
        %v610 = vpop.permute.xlu0 %609
        %vm612 = vcmask 523264
        %v614 = vsel %vm612, %v556, 0
        %v617 = vsel %vm612, %v557, 0
        %v620 = vsel %vm612, %v558, 0
        %v623 = vsel %vm612, %v559, 0
        %v626 = vsel %vm612, %v560, 0
        %v629 = vsel %vm612, %v561, 0
        %v632 = vsel %vm612, %v562, 0
        %v635 = vsel %vm612, %v563, 0
        %637 = vmatpush.msra.mxu0 0.0
        %638 = vmatpush.msra.mxu0 0.0
        %639 = vmatpush.msra.mxu0 0.0
        %640 = vmatpush.msra.mxu0 0.0
        %641 = vmatpush.msra.mxu0 0.0
        %642 = vmatpush.msra.mxu0 0.0
        %643 = vmatpush.msra.mxu0 0.0
        %644 = vmatpush.msra.mxu0 0.0
        %645 = vmatpush.msra.mxu0 %v554
        %646 = vmatpush.msra.mxu0 %v552
        %647 = vmatpush.msra.mxu0 %v550
        %648 = vmatpush.msra.mxu0 %v548
        %649 = vmatpush.msra.mxu0 %v546
        %650 = vmatpush.msra.mxu0 %v544
        %651 = vmatpush.msra.mxu0 %v542
        %652 = vmatpush.msra.mxu0 %v540
        %653 = vmatmul.f32.gmra.mxu0 %v614
        %v654 = vpop.f32.mrf.mxu0
        %v655 = vadd.f32 %v575, %v654
        %656 = vmatmul.f32.gmra.mxu0 %v617
        %v657 = vpop.f32.mrf.mxu0
        %v658 = vadd.f32 %v580, %v657
        %659 = vmatmul.f32.gmra.mxu0 %v620
        %v660 = vpop.f32.mrf.mxu0
        %v661 = vadd.f32 %v585, %v660
        %662 = vmatmul.f32.gmra.mxu0 %v623
        %v663 = vpop.f32.mrf.mxu0
        %v664 = vadd.f32 %v590, %v663
        %665 = vmatmul.f32.gmra.mxu0 %v626
        %v666 = vpop.f32.mrf.mxu0
        %v667 = vadd.f32 %v595, %v666
        %668 = vmatmul.f32.gmra.mxu0 %v629
        %v669 = vpop.f32.mrf.mxu0
        %v670 = vadd.f32 %v600, %v669
        %671 = vmatmul.f32.gmra.mxu0 %v632
        %v672 = vpop.f32.mrf.mxu0
        %v673 = vadd.f32 %v605, %v672
        %674 = vmatmul.f32.gmra.mxu0 %v635
        %v675 = vpop.f32.mrf.mxu0
        %v676 = vadd.f32 %v610, %v675
        %677 = vdwg.mxu0
        %678 = vmatpush.msra.mxu0 0.0
        %679 = vmatpush.msra.mxu0 0.0
        %680 = vmatpush.msra.mxu0 0.0
        %681 = vmatpush.msra.mxu0 0.0
        %682 = vmatpush.msra.mxu0 0.0
        %683 = vmatpush.msra.mxu0 0.0
        %684 = vmatpush.msra.mxu0 0.0
        %685 = vmatpush.msra.mxu0 0.0
        %686 = vmatpush.msra.mxu0 %v555
        %687 = vmatpush.msra.mxu0 %v553
        %688 = vmatpush.msra.mxu0 %v551
        %689 = vmatpush.msra.mxu0 %v549
        %690 = vmatpush.msra.mxu0 %v547
        %691 = vmatpush.msra.mxu0 %v545
        %692 = vmatpush.msra.mxu0 %v543
        %693 = vmatpush.msra.mxu0 %v541
        %694 = vmatmul.f32.gmra.mxu0 %v614
        %v695 = vpop.f32.mrf.mxu0
        %v696 = vadd.f32 %v575, %v695
        %697 = vmatmul.f32.gmra.mxu0 %v617
        %v698 = vpop.f32.mrf.mxu0
        %v699 = vadd.f32 %v580, %v698
        %700 = vmatmul.f32.gmra.mxu0 %v620
        %v701 = vpop.f32.mrf.mxu0
        %v702 = vadd.f32 %v585, %v701
        %703 = vmatmul.f32.gmra.mxu0 %v623
        %v704 = vpop.f32.mrf.mxu0
        %v705 = vadd.f32 %v590, %v704
        %706 = vmatmul.f32.gmra.mxu0 %v626
        %v707 = vpop.f32.mrf.mxu0
        %v708 = vadd.f32 %v595, %v707
        %709 = vmatmul.f32.gmra.mxu0 %v629
        %v710 = vpop.f32.mrf.mxu0
        %v711 = vadd.f32 %v600, %v710
        %712 = vmatmul.f32.gmra.mxu0 %v632
        %v713 = vpop.f32.mrf.mxu0
        %v714 = vadd.f32 %v605, %v713
        %715 = vmatmul.f32.gmra.mxu0 %v635
        %v716 = vpop.f32.mrf.mxu0
        %v717 = vadd.f32 %v610, %v716
        %718 = vdwg.mxu0
        %v719 = vmax.f32 %v655, 0.0
        %v720 = vmax.f32 %v696, 0.0
        %v721 = vmax.f32 %v658, 0.0
        %v722 = vmax.f32 %v699, 0.0
        %v723 = vmax.f32 %v661, 0.0
        %v724 = vmax.f32 %v702, 0.0
        %v725 = vmax.f32 %v664, 0.0
        %v726 = vmax.f32 %v705, 0.0
        %v727 = vmax.f32 %v667, 0.0
        %v728 = vmax.f32 %v708, 0.0
        %v729 = vmax.f32 %v670, 0.0
        %v730 = vmax.f32 %v711, 0.0
        %v731 = vmax.f32 %v673, 0.0
        %v732 = vmax.f32 %v714, 0.0
        %v733 = vmax.f32 %v676, 0.0
        %v734 = vmax.f32 %v717, 0.0
        %v735 = vld [vmem:[%s5] sm:$0xff]
        %v736 = vld [vmem:[%s5 + $0x8] sm:$0xff]
        %v737 = vld [vmem:[%s5 + $0x10] sm:$0xff]
        %v738 = vld [vmem:[%s5 + $0x18] sm:$0xff]
        %v739 = vld [vmem:[%s6] sm:$0xff]
        %v740 = vld [vmem:[%s6 + $0x8] sm:$0xff]
        %v741 = vld [vmem:[%s6 + $0x10] sm:$0xff]
        %v742 = vld [vmem:[%s6 + $0x18] sm:$0xff]
        %744 = vset.pattern.permute.xlu0 0
        %745 = vperm.xlu0 %744, %v739
        %v746 = vpop.permute.xlu0 %745
        %749 = vset.pattern.permute.xlu0 0
        %750 = vperm.xlu0 %749, %v740
        %v751 = vpop.permute.xlu0 %750
        %754 = vset.pattern.permute.xlu0 0
        %755 = vperm.xlu0 %754, %v741
        %v756 = vpop.permute.xlu0 %755
        %759 = vset.pattern.permute.xlu0 0
        %760 = vperm.xlu0 %759, %v742
        %v761 = vpop.permute.xlu0 %760
        %v764 = vsel %vm612, %v735, 0
        %v767 = vsel %vm612, %v736, 0
        %v770 = vsel %vm612, %v737, 0
        %v773 = vsel %vm612, %v738, 0
        %775 = vmatpush.msra.mxu0 0.0
        %776 = vmatpush.msra.mxu0 0.0
        %777 = vmatpush.msra.mxu0 0.0
        %778 = vmatpush.msra.mxu0 0.0
        %779 = vmatpush.msra.mxu0 0.0
        %780 = vmatpush.msra.mxu0 0.0
        %781 = vmatpush.msra.mxu0 0.0
        %782 = vmatpush.msra.mxu0 0.0
        %783 = vmatpush.msra.mxu0 %v733
        %784 = vmatpush.msra.mxu0 %v731
        %785 = vmatpush.msra.mxu0 %v729
        %786 = vmatpush.msra.mxu0 %v727
        %787 = vmatpush.msra.mxu0 %v725
        %788 = vmatpush.msra.mxu0 %v723
        %789 = vmatpush.msra.mxu0 %v721
        %790 = vmatpush.msra.mxu0 %v719
        %791 = vmatmul.f32.gmra.mxu0 %v764
        %v792 = vpop.f32.mrf.mxu0
        %v793 = vadd.f32 %v746, %v792
        %794 = vmatmul.f32.gmra.mxu0 %v767
        %v795 = vpop.f32.mrf.mxu0
        %v796 = vadd.f32 %v751, %v795
        %797 = vmatmul.f32.gmra.mxu0 %v770
        %v798 = vpop.f32.mrf.mxu0
        %v799 = vadd.f32 %v756, %v798
        %800 = vmatmul.f32.gmra.mxu0 %v773
        %v801 = vpop.f32.mrf.mxu0
        %v802 = vadd.f32 %v761, %v801
        %803 = vdwg.mxu0
        %804 = vmatpush.msra.mxu0 0.0
        %805 = vmatpush.msra.mxu0 0.0
        %806 = vmatpush.msra.mxu0 0.0
        %807 = vmatpush.msra.mxu0 0.0
        %808 = vmatpush.msra.mxu0 0.0
        %809 = vmatpush.msra.mxu0 0.0
        %810 = vmatpush.msra.mxu0 0.0
        %811 = vmatpush.msra.mxu0 0.0
        %812 = vmatpush.msra.mxu0 %v734
        %813 = vmatpush.msra.mxu0 %v732
        %814 = vmatpush.msra.mxu0 %v730
        %815 = vmatpush.msra.mxu0 %v728
        %816 = vmatpush.msra.mxu0 %v726
        %817 = vmatpush.msra.mxu0 %v724
        %818 = vmatpush.msra.mxu0 %v722
        %819 = vmatpush.msra.mxu0 %v720
        %820 = vmatmul.f32.gmra.mxu0 %v764
        %v821 = vpop.f32.mrf.mxu0
        %v822 = vadd.f32 %v746, %v821
        %823 = vmatmul.f32.gmra.mxu0 %v767
        %v824 = vpop.f32.mrf.mxu0
        %v825 = vadd.f32 %v751, %v824
        %826 = vmatmul.f32.gmra.mxu0 %v770
        %v827 = vpop.f32.mrf.mxu0
        %v828 = vadd.f32 %v756, %v827
        %829 = vmatmul.f32.gmra.mxu0 %v773
        %v830 = vpop.f32.mrf.mxu0
        %v831 = vadd.f32 %v761, %v830
        %832 = vdwg.mxu0
        %v833 = vmax.f32 %v793, 0.0
        %v834 = vmax.f32 %v822, 0.0
        %v835 = vmax.f32 %v796, 0.0
        %v836 = vmax.f32 %v825, 0.0
        %v837 = vmax.f32 %v799, 0.0
        %v838 = vmax.f32 %v828, 0.0
        %v839 = vmax.f32 %v802, 0.0
        %v840 = vmax.f32 %v831, 0.0
        %v841 = vld [vmem:[%s7] sm:$0xff]
        %v842 = vld [vmem:[%s7 + $0x8] sm:$0xff]
        %v843 = vld [vmem:[%s7 + $0x10] sm:$0xff]
        %v844 = vld [vmem:[%s7 + $0x18] sm:$0xff]
        %846 = vset.pattern.permute.xlu0 0
        %847 = vperm.xlu0 %846, %v841
        %v848 = vpop.permute.xlu0 %847
        %851 = vset.pattern.permute.xlu0 0
        %852 = vperm.xlu0 %851, %v842
        %v853 = vpop.permute.xlu0 %852
        %856 = vset.pattern.permute.xlu0 0
        %857 = vperm.xlu0 %856, %v843
        %v858 = vpop.permute.xlu0 %857
        %861 = vset.pattern.permute.xlu0 0
        %862 = vperm.xlu0 %861, %v844
        %v863 = vpop.permute.xlu0 %862
        %v865 = vmul.f32 %v833, %v848
        %v866 = vmul.f32 %v834, %v848
        %v867 = vmul.f32 %v835, %v853
        %v868 = vmul.f32 %v836, %v853
        %v869 = vmul.f32 %v837, %v858
        %v870 = vmul.f32 %v838, %v858
        %v871 = vmul.f32 %v839, %v863
        %v872 = vmul.f32 %v840, %v863
        %v873 = vadd.f32 %v865, %v867
        %v874 = vadd.f32 %v873, %v869
        %v875 = vadd.f32 %v874, %v871
        %v876 = vrot.slane %v875, 4
        %v877 = vadd.f32 %v875, %v876
        %v878 = vrot.slane %v877, 2
        %v879 = vadd.f32 %v877, %v878
        %v880 = vrot.slane %v879, 1
        %v881 = vadd.f32 %v879, %v880
        %v882 = vadd.f32 %v866, %v868
        %v883 = vadd.f32 %v882, %v870
        %v884 = vadd.f32 %v883, %v872
        %v885 = vrot.slane %v884, 4
        %v886 = vadd.f32 %v884, %v885
        %v887 = vrot.slane %v886, 2
        %v888 = vadd.f32 %v886, %v887
        %v889 = vrot.slane %v888, 1
        %v890 = vadd.f32 %v888, %v889
        %v891 = vld [vmem:[#allocation2] sm:$0x1]
        %893 = vset.pattern.permute.xlu0 0
        %894 = vperm.xlu0 %893, %v891
        %v895 = vpop.permute.xlu0 %894
        %v897 = vperm.slane %v895, 0
        %v898 = vadd.f32 %v881, %v897
        %v899 = vadd.f32 %v890, %v897
        %v902 = vrot.slane %v899, 7
        %vm903 = vcmask 1040384
        %v904 = vsel %vm903, %v898, %v902
        %v906 = vlaneseq
        %vm907 = vcmp.ge.s32.totalorder %v906, 0
        %vm908 = vcmp.lt.s32.totalorder %v906, 256
        %vm909 = vmand %vm907, %vm908
        %910 = vst.msk [vmem:[%s366] sm:$0x3] %vm909, %v904
        %s911 = sand.u32 %s227, 1
        %s912 = scalar_lea.sflag [#allocation5], %s911
        %s913 = sand.u32 %s227, 1
        %s914 = smul.addr %s913, 2
        %s915 = scalar_lea.vmem [#allocation4], %s914
        // Predicated region
        $region80: #{transnet_forward.1} parent=74 // pred_check
          %p916 = pneg %p237
        $region81: #{transnet_forward.1} parent=74 // pred_check_branch
          %918 = sbr.rel (%p916) target = $region83
        $region82: #{transnet_forward.1} parent=74 // pred_region
          %s919 = smul.u32 2, %s25
          %921 = vsyncadd %s912, 0
          %s922 = scalar_lea.hbm %s9, %s919
          %s924 = sshll.u32 %s915, 4
          %s925 = int_to_ptr.vmem [resolvable:$true] %s924
          %s926 = sshll.u32 %s922, 4
          %s927 = int_to_ptr.hbm [resolvable:$true] %s926
          %929 = dma.vmem_to_hbm [thread:$0]  %s925, 32, %s927, %s912
        $region83: #{transnet_forward.1} parent=74 // pred_fallthru
          _
      $region75: #{transnet_forward.1} parent=5 // pred_fallthru
        _
      %p930 = scmp.le.s32.totalorder 2, %s20
      // Predicated region
      $region84: #{transnet_forward.1} parent=5 // pred_check
        %p931 = pneg %p930
      $region85: #{transnet_forward.1} parent=5 // pred_check_branch
        %933 = sbr.rel (%p931) target = $region87
      $region86: #{transnet_forward.1} parent=5 // pred_region
        %s934 = ssub.s32 %s20, 2
        // Predicated region
        $region88: #{transnet_forward.1} parent=86 // pred_check
          %p935 = pneg %p243
        $region89: #{transnet_forward.1} parent=86 // pred_check_branch
          %937 = sbr.rel (%p935) target = $region91
        $region90: #{transnet_forward.1} parent=86 // pred_region
          %s938 = sand.u32 %s228, 1
          %s939 = scalar_lea.sflag [#allocation5], %s938
          %s940 = sand.u32 %s228, 1
          %s941 = smul.addr %s940, 2
          %s942 = scalar_lea.vmem [#allocation4], %s941
          %944 = dma.done %s939, 32
        $region91: #{transnet_forward.1} parent=86 // pred_fallthru
          _
      $region87: #{transnet_forward.1} parent=5 // pred_fallthru
        _
    $region6: #{transnet_forward.1} parent=1 // loop_footer
      %s24 = sadd.s32 1, %s20
    $region7: #{transnet_forward.1} parent=1 // loop_footer_branch
      %19 = sbr.rel target = $region3
    $region8: #{transnet_forward.1} parent=1 // loop_exit
      _
    %945 = vsyncpa [#allocation5], 1
    %s946 = scalar_lea.sflag [#allocation5], 1
    %947 = vsyncpa %s946, 1

</llo_original>
